<compile_context>
chip_gen: v7x
topology: tpu7x:2x2x1
jax: 0.10.0
libtpu: 0.0.40
codegen_flags: <defaults>
</compile_context>

<pallas_src>
import jax
import jax.numpy as jnp
from jax import lax
from jax.experimental import pallas as pl
from jax.experimental.pallas import tpu as pltpu


def _net_kernel(stu_ref, exer_ref, k1h_ref, k2h_ref, knr_ref, invc_ref,
                w1t_ref, w2t_ref, w3t_ref, b3_ref, out_ref):
    """One TILE_B slice of the prediction net; hot work lane-dense on K*E.

    stu_ref  : (TB, E)    gathered student embeddings (f32)
    exer_ref : (TB, E)    gathered exercise embeddings (f32)
    k1h_ref  : (1, K*E)   0.5 * kn_emb @ w1[:, E:].T, flattened (f32)
    k2h_ref  : (1, K*E)   0.5 * kn_emb @ w2[:, E:].T, flattened (f32)
    knr_ref  : (TB, K)    concept-relevance mask (f32)
    invc_ref : (TB, 1)    1 / count_of_concept (zero-guarded)
    w1t_ref  : (E, K*E)   0.5 * w1[:, :E].T tiled K times (MXU dtype)
    w2t_ref  : (E, K*E)   0.5 * w2[:, :E].T tiled K times (MXU dtype)
    w3t_ref  : (K, K*E)   lane-dense block-diagonal 0.5 * prednet_full3 weight
    b3_ref   : (1, 1)     prednet_full3 bias
    out_ref  : (TB, 1)
    """
    stu = stu_ref[...].astype(w1t_ref.dtype)      # tiny VPU cast (TB, E)
    exer = exer_ref[...].astype(w2t_ref.dtype)

    # MXU: 0.5-scaled halves, produced directly in the lane-dense (TB, K*E)
    # layout (weights pre-tiled in the wrapper), f32 accumulation.
    s = jnp.dot(stu, w1t_ref[...], preferred_element_type=jnp.float32)
    e = jnp.dot(exer, w2t_ref[...], preferred_element_type=jnp.float32)

    # EUP-dominant stage: one tanh + one add/sub per element of the two slabs.
    # sigmoid(pre1) - sigmoid(pre2) == 0.5*(tanh(pre1/2) - tanh(pre2/2));
    # the 0.5 is folded into w3t, the +1 terms cancel.
    d = jnp.tanh(s + k1h_ref[...]) - jnp.tanh(e + k2h_ref[...])   # (TB, K*E)

    # MXU: prednet_full3 as a transposed-RHS contraction on the lane axis.
    logits = lax.dot_general(
        d, w3t_ref[...],
        dimension_numbers=(((1,), (1,)), ((), ())),
        preferred_element_type=jnp.float32) + b3_ref[...]          # (TB, K)

    # Full sigmoid only on the tiny (TB, K) logits.
    o = 0.5 * (jnp.tanh(0.5 * logits) + 1.0)

    # Masked mean over concepts (reciprocal precomputed in the wrapper).
    out_ref[...] = jnp.sum(o * knr_ref[...], axis=1, keepdims=True) * invc_ref[...]


def net_forward(stu_id, exer_id, kn_r, params, *, tile_b=256,
                mxu_dtype=jnp.bfloat16):
    """Full Net.forward.  Embedding gathers + one-off weight reshuffles are
    plain-JAX glue; the prednet hot path runs in the Pallas kernel.

    tile_b must be a multiple of 8; use 128-512 for production batches
    (smaller on v7x so intermediates fit the 64 MiB VMEM and n_tiles >= 2).
    """
    stu_table = params["student_emb"]      # (S, E)
    exer_table = params["exercise_emb"]    # (N, E)
    kn_table = params["knowledge_emb"]     # (K, E)

    # TODO(synk): FusionLayer1 / FusionLayer2 (graph propagation; class not in
    # the provided source) are identity pass-throughs on the embedding tables.
    all_stu_emb, exer_emb, kn_emb = stu_table, exer_table, kn_table

    K, E = kn_emb.shape
    KE = K * E
    batch_stu = jnp.take(all_stu_emb, stu_id, axis=0).astype(jnp.float32)
    batch_exer = jnp.take(exer_emb, exer_id, axis=0).astype(jnp.float32)
    kn_r = kn_r.astype(jnp.float32)
    B = batch_stu.shape[0]

    w1, w2, w3, b3 = params["w1"], params["w2"], params["w3"], params["b3"]
    w1 = w1.astype(jnp.float32)
    w2 = w2.astype(jnp.float32)
    w3 = w3.astype(jnp.float32)

    # ---- hoisted / pre-transformed operands (tiny one-off XLA work) --------
    # K-side halves of prednet_full1/2, pre-scaled by 0.5 (sigmoid->tanh fold),
    # flattened so the (K, E) result lies along the lane axis at k*E + e.
    k1h = (0.5 * (kn_emb @ w1[:, E:].T)).reshape(1, KE)
    k2h = (0.5 * (kn_emb @ w2[:, E:].T)).reshape(1, KE)
    # Student/exercise halves: pre-scaled by 0.5, pre-transposed, tiled K
    # times so the in-kernel matmul directly yields the lane-dense layout.
    w1t = jnp.tile(0.5 * w1[:, :E].T, (1, K)).astype(mxu_dtype)    # (E, K*E)
    w2t = jnp.tile(0.5 * w2[:, :E].T, (1, K)).astype(mxu_dtype)    # (E, K*E)
    # prednet_full3 as a lane-dense block-diagonal (K, K*E) matrix with the
    # remaining 0.5 folded in (transposed-RHS MXU contraction in the kernel).
    w3t = (jnp.eye(K, dtype=jnp.float32)[:, :, None] *
           (0.5 * w3.reshape(E))[None, None, :]).reshape(K, KE)

    # Masked-mean denominator, zero-guarded (also covers padded rows).
    count = jnp.sum(kn_r, axis=1, keepdims=True)
    inv_count = jnp.where(count > 0, 1.0 / count, 0.0)

    # ---- pad batch to a tile multiple and launch the grid ------------------
    b8 = ((B + 7) // 8) * 8
    tile_b = max(8, (min(int(tile_b), b8) // 8) * 8)   # multiple-of-8 sublane rule
    n_tiles = pl.cdiv(B, tile_b)
    b_pad = n_tiles * tile_b
    pad = b_pad - B
    if pad:
        batch_stu = jnp.pad(batch_stu, ((0, pad), (0, 0)))
        batch_exer = jnp.pad(batch_exer, ((0, pad), (0, 0)))
        kn_r = jnp.pad(kn_r, ((0, pad), (0, 0)))
        inv_count = jnp.pad(inv_count, ((0, pad), (0, 0)))

    # Explicit VMEM budget (double-buffered blocks + live f32 intermediates).
    wbytes = jnp.dtype(mxu_dtype).itemsize
    vmem_est = (
        2 * (2 * tile_b * E * 4)            # stu/exer blocks
        + 2 * (2 * KE * 4)                  # k1h/k2h
        + 2 * (2 * E * KE * wbytes)         # tiled weight halves
        + 2 * (K * KE * 4)                  # w3t
        + 2 * (tile_b * K * 4 + tile_b * 8 + 4)
        + 4 * tile_b * KE * 4               # live f32 slabs in the kernel
    )
    vmem_limit = int(min(max(vmem_est + (8 << 20), 32 << 20), 64 << 20))

    out = pl.pallas_call(
        _net_kernel,
        out_shape=jax.ShapeDtypeStruct((b_pad, 1), jnp.float32),
        grid_spec=pltpu.PrefetchScalarGridSpec(
            num_scalar_prefetch=0,
            grid=(n_tiles,),
            in_specs=[
                pl.BlockSpec((tile_b, E), lambda i: (i, 0)),     # batch_stu
                pl.BlockSpec((tile_b, E), lambda i: (i, 0)),     # batch_exer
                pl.BlockSpec((1, KE), lambda i: (0, 0)),         # k1h
                pl.BlockSpec((1, KE), lambda i: (0, 0)),         # k2h
                pl.BlockSpec((tile_b, K), lambda i: (i, 0)),     # kn_r
                pl.BlockSpec((tile_b, 1), lambda i: (i, 0)),     # inv_count
                pl.BlockSpec((E, KE), lambda i: (0, 0)),         # w1t
                pl.BlockSpec((E, KE), lambda i: (0, 0)),         # w2t
                pl.BlockSpec((K, KE), lambda i: (0, 0)),         # w3t
                pl.BlockSpec((1, 1), lambda i: (0, 0)),          # b3
            ],
            out_specs=pl.BlockSpec((tile_b, 1), lambda i: (i, 0)),
        ),
        compiler_params=pltpu.CompilerParams(
            dimension_semantics=("parallel",),
            vmem_limit_bytes=vmem_limit),
    )(batch_stu, batch_exer, k1h, k2h, kn_r, inv_count, w1t, w2t, w3t, b3)

    return out[:B]


def _xavier_normal(key, shape):
    fan_out, fan_in = shape
    std = (2.0 / (fan_in + fan_out)) ** 0.5
    return std * jax.random.normal(key, shape, dtype=jnp.float32)


def make_params(key, student_n, exer_n, knowledge_n, emb):
    ks = jax.random.split(key, 7)
    return {
        "student_emb":   _xavier_normal(ks[0], (student_n, emb)),
        "exercise_emb":  _xavier_normal(ks[1], (exer_n, emb)),
        "knowledge_emb": _xavier_normal(ks[2], (knowledge_n, emb)),
        "w1": _xavier_normal(ks[3], (emb, 2 * emb)),   # prednet_full1.weight
        "w2": _xavier_normal(ks[4], (emb, 2 * emb)),   # prednet_full2.weight
        "w3": _xavier_normal(ks[5], (1, emb)),         # prednet_full3.weight
        "b3": jnp.zeros((1, 1), jnp.float32),          # prednet_full3.bias
    }


def _reference(stu_id, exer_id, kn_r, params):
    """Pure-JAX f32 reference of the same forward (sanity check)."""
    E = params["w1"].shape[0]
    K = params["knowledge_emb"].shape[0]
    stu = jnp.take(params["student_emb"], stu_id, axis=0)
    exer = jnp.take(params["exercise_emb"], exer_id, axis=0)
    kn = params["knowledge_emb"]
    B = stu.shape[0]
    stu_v = jnp.broadcast_to(stu[:, None, :], (B, K, E))
    exer_v = jnp.broadcast_to(exer[:, None, :], (B, K, E))
    kn_v = jnp.broadcast_to(kn[None, :, :], (B, K, E))
    pref = jax.nn.sigmoid(jnp.concatenate([stu_v, kn_v], -1) @ params["w1"].T)
    diff = jax.nn.sigmoid(jnp.concatenate([exer_v, kn_v], -1) @ params["w2"].T)
    o = jax.nn.sigmoid((pref - diff) @ params["w3"].T + params["b3"][0, 0])
    kn_r = kn_r.astype(jnp.float32)
    sum_out = jnp.sum(o * kn_r[:, :, None], axis=1)
    cnt = jnp.sum(kn_r, axis=1, keepdims=True)
    return sum_out / cnt


if __name__ == "__main__":
    # small, deterministic config
    STUDENT_N, EXER_N, KNOWLEDGE_N, EMB, BATCH = 32, 32, 16, 32, 4

    key = jax.random.PRNGKey(0)
    k_par, k_stu, k_exe, k_knr = jax.random.split(key, 4)

    params = make_params(k_par, STUDENT_N, EXER_N, KNOWLEDGE_N, EMB)

    stu_id = jax.random.randint(k_stu, (BATCH,), 0, STUDENT_N)
    exer_id = jax.random.randint(k_exe, (BATCH,), 0, EXER_N)
    kn_r = jax.random.bernoulli(k_knr, 0.3, (BATCH, KNOWLEDGE_N)).astype(jnp.float32)
    kn_r = kn_r.at[:, 0].set(1.0)   # ensure at least one concept per row

    ref = _reference(stu_id, exer_id, kn_r, params)

    # Default path: bf16 MXU operands, f32 accumulation / elementwise.
    out = net_forward(stu_id, exer_id, kn_r, params)
    out = jax.block_until_ready(out)
    assert out.shape == (BATCH, 1)
    assert bool(jnp.allclose(out, ref, atol=1e-2, rtol=0.0))

    # Full-f32 path matches the reference tightly (checks the algebraic folds).
    out_f32 = net_forward(stu_id, exer_id, kn_r, params, mxu_dtype=jnp.float32)
    out_f32 = jax.block_until_ready(out_f32)
    assert bool(jnp.allclose(out_f32, ref, atol=1e-5, rtol=1e-5))

    print("KERNEL_OK")
</pallas_src>

<mosaic_0001>
module attributes {stable_mosaic.version = 11 : i64} {
  func.func @_net_kernel(%arg0: i32, %arg1: memref<8x32xf32, #tpu.memory_space<vmem>>, %arg2: memref<8x32xf32, #tpu.memory_space<vmem>>, %arg3: memref<1x512xf32, #tpu.memory_space<vmem>>, %arg4: memref<1x512xf32, #tpu.memory_space<vmem>>, %arg5: memref<8x16xf32, #tpu.memory_space<vmem>>, %arg6: memref<8x1xf32, #tpu.memory_space<vmem>>, %arg7: memref<32x512xbf16, #tpu.memory_space<vmem>>, %arg8: memref<32x512xbf16, #tpu.memory_space<vmem>>, %arg9: memref<16x512xf32, #tpu.memory_space<vmem>>, %arg10: memref<1x1xf32, #tpu.memory_space<vmem>>, %arg11: memref<8x1xf32, #tpu.memory_space<vmem>>) attributes {dimension_semantics = [#tpu.dimension_semantics<parallel>], iteration_bounds = array<i64: 1>, scalar_prefetch = 0 : i64, scratch_operands = 0 : i64, tpu.core_type = #tpu.core_type<tc>, window_params = [{transform_indices = @transform_0, window_bounds = array<i64: 8, 32>}, {transform_indices = @transform_1, window_bounds = array<i64: 8, 32>}, {pipeline_mode = #tpu.pipeline_mode<synchronous>, transform_indices = @transform_2, window_bounds = array<i64: 1, 512>}, {pipeline_mode = #tpu.pipeline_mode<synchronous>, transform_indices = @transform_3, window_bounds = array<i64: 1, 512>}, {transform_indices = @transform_4, window_bounds = array<i64: 8, 16>}, {transform_indices = @transform_5, window_bounds = array<i64: 8, 1>}, {pipeline_mode = #tpu.pipeline_mode<synchronous>, transform_indices = @transform_6, window_bounds = array<i64: 32, 512>}, {pipeline_mode = #tpu.pipeline_mode<synchronous>, transform_indices = @transform_7, window_bounds = array<i64: 32, 512>}, {pipeline_mode = #tpu.pipeline_mode<synchronous>, transform_indices = @transform_8, window_bounds = array<i64: 16, 512>}, {pipeline_mode = #tpu.pipeline_mode<synchronous>, transform_indices = @transform_9, window_bounds = array<i64: 1, 1>}, {transform_indices = @transform_10, window_bounds = array<i64: 8, 1>}]} {
    %c0 = arith.constant 0 : index
    %c0_0 = arith.constant 0 : index
    %0 = vector.load %arg1[%c0, %c0_0] : memref<8x32xf32, #tpu.memory_space<vmem>>, vector<8x32xf32>
    %1 = arith.truncf %0 : vector<8x32xf32> to vector<8x32xbf16>
    %c0_1 = arith.constant 0 : index
    %c0_2 = arith.constant 0 : index
    %2 = vector.load %arg2[%c0_1, %c0_2] : memref<8x32xf32, #tpu.memory_space<vmem>>, vector<8x32xf32>
    %3 = arith.truncf %2 : vector<8x32xf32> to vector<8x32xbf16>
    %c0_3 = arith.constant 0 : index
    %c0_4 = arith.constant 0 : index
    %4 = vector.load %arg7[%c0_3, %c0_4] : memref<32x512xbf16, #tpu.memory_space<vmem>>, vector<32x512xbf16>
    %cst = arith.constant dense<0.000000e+00> : vector<8x512xf32>
    %5 = tpu.matmul %1, %4, %cst {dimension_numbers = #tpu.dot_dimension_numbers<[1], [0], [0], [1], [0, 0, 1, 1], [], []>} : vector<8x32xbf16>, vector<32x512xbf16>, vector<8x512xf32> -> vector<8x512xf32>
    %c0_5 = arith.constant 0 : index
    %c0_6 = arith.constant 0 : index
    %6 = vector.load %arg8[%c0_5, %c0_6] : memref<32x512xbf16, #tpu.memory_space<vmem>>, vector<32x512xbf16>
    %cst_7 = arith.constant dense<0.000000e+00> : vector<8x512xf32>
    %7 = tpu.matmul %3, %6, %cst_7 {dimension_numbers = #tpu.dot_dimension_numbers<[1], [0], [0], [1], [0, 0, 1, 1], [], []>} : vector<8x32xbf16>, vector<32x512xbf16>, vector<8x512xf32> -> vector<8x512xf32>
    %c0_8 = arith.constant 0 : index
    %c0_9 = arith.constant 0 : index
    %8 = vector.load %arg3[%c0_8, %c0_9] : memref<1x512xf32, #tpu.memory_space<vmem>>, vector<1x512xf32>
    %9 = vector.broadcast %8 : vector<1x512xf32> to vector<8x512xf32>
    %10 = arith.addf %5, %9 : vector<8x512xf32>
    %11 = math.tanh %10 : vector<8x512xf32>
    %c0_10 = arith.constant 0 : index
    %c0_11 = arith.constant 0 : index
    %12 = vector.load %arg4[%c0_10, %c0_11] : memref<1x512xf32, #tpu.memory_space<vmem>>, vector<1x512xf32>
    %13 = vector.broadcast %12 : vector<1x512xf32> to vector<8x512xf32>
    %14 = arith.addf %7, %13 : vector<8x512xf32>
    %15 = math.tanh %14 : vector<8x512xf32>
    %16 = arith.subf %11, %15 : vector<8x512xf32>
    %c0_12 = arith.constant 0 : index
    %c0_13 = arith.constant 0 : index
    %17 = vector.load %arg9[%c0_12, %c0_13] : memref<16x512xf32, #tpu.memory_space<vmem>>, vector<16x512xf32>
    %cst_14 = arith.constant dense<0.000000e+00> : vector<8x16xf32>
    %18 = tpu.matmul %16, %17, %cst_14 {dimension_numbers = #tpu.dot_dimension_numbers<[1], [1], [0], [0], [0, 0, 1, 0], [], []>} : vector<8x512xf32>, vector<16x512xf32>, vector<8x16xf32> -> vector<8x16xf32>
    %c0_15 = arith.constant 0 : index
    %c0_16 = arith.constant 0 : index
    %19 = vector.load %arg10[%c0_15, %c0_16] : memref<1x1xf32, #tpu.memory_space<vmem>>, vector<1x1xf32>
    %20 = vector.broadcast %19 : vector<1x1xf32> to vector<8x16xf32>
    %21 = arith.addf %18, %20 : vector<8x16xf32>
    %cst_17 = arith.constant 5.000000e-01 : f32
    %22 = vector.broadcast %cst_17 : f32 to vector<8x16xf32>
    %23 = arith.mulf %22, %21 : vector<8x16xf32>
    %24 = math.tanh %23 : vector<8x16xf32>
    %cst_18 = arith.constant 1.000000e+00 : f32
    %25 = vector.broadcast %cst_18 : f32 to vector<8x16xf32>
    %26 = arith.addf %24, %25 : vector<8x16xf32>
    %cst_19 = arith.constant 5.000000e-01 : f32
    %27 = vector.broadcast %cst_19 : f32 to vector<8x16xf32>
    %28 = arith.mulf %27, %26 : vector<8x16xf32>
    %c0_20 = arith.constant 0 : index
    %c0_21 = arith.constant 0 : index
    %29 = vector.load %arg5[%c0_20, %c0_21] : memref<8x16xf32, #tpu.memory_space<vmem>>, vector<8x16xf32>
    %30 = arith.mulf %28, %29 : vector<8x16xf32>
    %cst_22 = arith.constant dense<0.000000e+00> : vector<8xf32>
    %31 = vector.multi_reduction <add>, %30, %cst_22 [1] : vector<8x16xf32> to vector<8xf32>
    %32 = vector.shape_cast %31 : vector<8xf32> to vector<8x1xf32>
    %c0_23 = arith.constant 0 : index
    %c0_24 = arith.constant 0 : index
    %33 = vector.load %arg6[%c0_23, %c0_24] : memref<8x1xf32, #tpu.memory_space<vmem>>, vector<8x1xf32>
    %34 = arith.mulf %32, %33 : vector<8x1xf32>
    %c0_25 = arith.constant 0 : index
    %c0_26 = arith.constant 0 : index
    %35 = vector.load %arg11[%c0_25, %c0_26] : memref<8x1xf32, #tpu.memory_space<vmem>>, vector<8x1xf32>
    tpu.vector_store %arg11[%c0_25, %c0_26], %34 {strides = array<i32>} : memref<8x1xf32, #tpu.memory_space<vmem>>, vector<8x1xf32>,
    return
  }
  func.func @transform_0(%arg0: i32) -> (i32, i32) {
    %c0_i32 = arith.constant 0 : i32
    %c0_i32_0 = arith.constant 0 : i32
    return %arg0, %c0_i32 : i32, i32
  }
  func.func @transform_1(%arg0: i32) -> (i32, i32) {
    %c0_i32 = arith.constant 0 : i32
    %c0_i32_0 = arith.constant 0 : i32
    return %arg0, %c0_i32 : i32, i32
  }
  func.func @transform_2(%arg0: i32) -> (i32, i32) {
    %c0_i32 = arith.constant 0 : i32
    %c0_i32_0 = arith.constant 0 : i32
    %c0_i32_1 = arith.constant 0 : i32
    return %c0_i32, %c0_i32_0 : i32, i32
  }
  func.func @transform_3(%arg0: i32) -> (i32, i32) {
    %c0_i32 = arith.constant 0 : i32
    %c0_i32_0 = arith.constant 0 : i32
    %c0_i32_1 = arith.constant 0 : i32
    return %c0_i32, %c0_i32_0 : i32, i32
  }
  func.func @transform_4(%arg0: i32) -> (i32, i32) {
    %c0_i32 = arith.constant 0 : i32
    %c0_i32_0 = arith.constant 0 : i32
    return %arg0, %c0_i32 : i32, i32
  }
  func.func @transform_5(%arg0: i32) -> (i32, i32) {
    %c0_i32 = arith.constant 0 : i32
    %c0_i32_0 = arith.constant 0 : i32
    return %arg0, %c0_i32 : i32, i32
  }
  func.func @transform_6(%arg0: i32) -> (i32, i32) {
    %c0_i32 = arith.constant 0 : i32
    %c0_i32_0 = arith.constant 0 : i32
    %c0_i32_1 = arith.constant 0 : i32
    return %c0_i32, %c0_i32_0 : i32, i32
  }
  func.func @transform_7(%arg0: i32) -> (i32, i32) {
    %c0_i32 = arith.constant 0 : i32
    %c0_i32_0 = arith.constant 0 : i32
    %c0_i32_1 = arith.constant 0 : i32
    return %c0_i32, %c0_i32_0 : i32, i32
  }
  func.func @transform_8(%arg0: i32) -> (i32, i32) {
    %c0_i32 = arith.constant 0 : i32
    %c0_i32_0 = arith.constant 0 : i32
    %c0_i32_1 = arith.constant 0 : i32
    return %c0_i32, %c0_i32_0 : i32, i32
  }
  func.func @transform_9(%arg0: i32) -> (i32, i32) {
    %c0_i32 = arith.constant 0 : i32
    %c0_i32_0 = arith.constant 0 : i32
    %c0_i32_1 = arith.constant 0 : i32
    return %c0_i32, %c0_i32_0 : i32, i32
  }
  func.func @transform_10(%arg0: i32) -> (i32, i32) {
    %c0_i32 = arith.constant 0 : i32
    %c0_i32_0 = arith.constant 0 : i32
    return %arg0, %c0_i32 : i32, i32
  }
}

</mosaic_0001>

<llo_original>
// kernel: tpu_custom_call.1
$region0: #{tpu_custom_call.1}
  #allocation0 [shape = 'u32[]', space=smem, size = 0x4, offset = 0x4, fixed_abs, tag = 'smem constant byte address 0x4 - core index']
  #allocation1 [shape = 'u32[144,128]{1,0:T(1,128)}', space=vmem, size = 0x12000, scoped, tag = 'internal scratch']
  #allocation2 [shape = 'f32[1,1]{1,0:T(1,128)S(1)}', space=vmem, size = 0x200, scoped, tag = 'scoped memory for tpu_custom_call.1']
  %s0 = inlined_call_operand.vmem [shape: f32[8,32], index: 0, kind: input, shape index: {}]
  %s1 = inlined_call_operand.vmem [shape: f32[8,32], index: 1, kind: input, shape index: {}]
  %s2 = inlined_call_operand.hbm [shape: f32[1,512], index: 2, kind: input, shape index: {}]
  %s3 = inlined_call_operand.hbm [shape: f32[1,512], index: 3, kind: input, shape index: {}]
  %s4 = inlined_call_operand.vmem [shape: f32[8,16], index: 4, kind: input, shape index: {}]
  %s5 = inlined_call_operand.vmem [shape: f32[8,1], index: 5, kind: input, shape index: {}]
  %s6 = inlined_call_operand.hbm [shape: bf16[32,512], index: 6, kind: input, shape index: {}]
  %s7 = inlined_call_operand.hbm [shape: bf16[32,512], index: 7, kind: input, shape index: {}]
  %s8 = inlined_call_operand.hbm [shape: f32[16,512], index: 8, kind: input, shape index: {}]
  %s9 = inlined_call_operand.<no memory space> [shape: f32[1,1], index: 9, kind: input, shape index: {}]
  %s10 = inlined_call_operand.vmem [shape: f32[8,1], index: 10, kind: output, shape index: {}]
  %s11 = sld [smem:[#allocation0]]
  $region70: #{tpu_custom_call.1} parent=0
    _
  %s13 = ssub.s32 1, %s11
  %s14 = scalar_select 0, %s13, %s11
  %v15 = vstv %s9
  %16 = vst [vmem:[#allocation2] sm:$0x1] %v15
  $region1: #{tpu_custom_call.1} parent=0
    #allocation3 [shape = 'u8[2048]{0}', space=vmem, size = 0x800, scoped, tag = 'input window, operand 2, single buffered']
    #allocation4 [shape = 's32[1]{0}', space=sflag, size = 0x4, scoped, tag = 'scoped memory for tpu_custom_call.1']
    #allocation5 [shape = 'u8[2048]{0}', space=vmem, size = 0x800, scoped, tag = 'input window, operand 3, single buffered']
    #allocation6 [shape = 's32[1]{0}', space=sflag, size = 0x4, scoped, tag = 'scoped memory for tpu_custom_call.1']
    #allocation7 [shape = 'u8[32768]{0}', space=vmem, size = 0x8000, scoped, tag = 'input window, operand 6, single buffered']
    #allocation8 [shape = 'u8[32768]{0}', space=vmem, size = 0x8000, scoped, tag = 'input window, operand 7, single buffered']
    #allocation9 [shape = 's32[1]{0}', space=sflag, size = 0x4, scoped, tag = 'scoped memory for tpu_custom_call.1']
    #allocation10 [shape = 'u8[32768]{0}', space=vmem, size = 0x8000, scoped, tag = 'input window, operand 8, single buffered']
    %17 = vsyncpa [#allocation4], 0
    %18 = vsyncpa [#allocation6], 0
    %19 = vsyncpa [#allocation9], 0
    // Predicated region
    $region2: #{tpu_custom_call.1} parent=1 // pred_check
      _
    $region3: #{tpu_custom_call.1} parent=1 // pred_check_branch
      %21 = sbr.rel (0) target = $region5
    $region4: #{tpu_custom_call.1} parent=1 // pred_region
      _
    $region5: #{tpu_custom_call.1} parent=1 // pred_fallthru
      _
    // Predicated region
    $region6: #{tpu_custom_call.1} parent=1 // pred_check
      _
    $region7: #{tpu_custom_call.1} parent=1 // pred_check_branch
      %23 = sbr.rel (0) target = $region9
    $region8: #{tpu_custom_call.1} parent=1 // pred_region
      _
    $region9: #{tpu_custom_call.1} parent=1 // pred_fallthru
      _
    // Predicated region
    $region10: #{tpu_custom_call.1} parent=1 // pred_check
      _
    $region11: #{tpu_custom_call.1} parent=1 // pred_check_branch
      %25 = sbr.rel (0) target = $region13
    $region12: #{tpu_custom_call.1} parent=1 // pred_region
      %s27 = ssub.s32 64, 64
      %28 = vsyncadd [#allocation4], %s27
      %s30 = sshll.u32 [#allocation3], 4
      %s31 = int_to_ptr.vmem [resolvable:$true] %s30
      %33 = dma.hbm_to_vmem [thread:$0]  %s2, 64, %s31, [#allocation4]
    $region13: #{tpu_custom_call.1} parent=1 // pred_fallthru
      _
    // Predicated region
    $region14: #{tpu_custom_call.1} parent=1 // pred_check
      _
    $region15: #{tpu_custom_call.1} parent=1 // pred_check_branch
      %35 = sbr.rel (0) target = $region17
    $region16: #{tpu_custom_call.1} parent=1 // pred_region
      %s37 = ssub.s32 64, 64
      %38 = vsyncadd [#allocation6], %s37
      %s40 = sshll.u32 [#allocation5], 4
      %s41 = int_to_ptr.vmem [resolvable:$true] %s40
      %43 = dma.hbm_to_vmem [thread:$0]  %s3, 64, %s41, [#allocation6]
    $region17: #{tpu_custom_call.1} parent=1 // pred_fallthru
      _
    // Predicated region
    $region18: #{tpu_custom_call.1} parent=1 // pred_check
      _
    $region19: #{tpu_custom_call.1} parent=1 // pred_check_branch
      %45 = sbr.rel (0) target = $region21
    $region20: #{tpu_custom_call.1} parent=1 // pred_region
      _
    $region21: #{tpu_custom_call.1} parent=1 // pred_fallthru
      _
    // Predicated region
    $region22: #{tpu_custom_call.1} parent=1 // pred_check
      _
    $region23: #{tpu_custom_call.1} parent=1 // pred_check_branch
      %47 = sbr.rel (0) target = $region25
    $region24: #{tpu_custom_call.1} parent=1 // pred_region
      _
    $region25: #{tpu_custom_call.1} parent=1 // pred_fallthru
      _
    // Predicated region
    $region26: #{tpu_custom_call.1} parent=1 // pred_check
      _
    $region27: #{tpu_custom_call.1} parent=1 // pred_check_branch
      %49 = sbr.rel (0) target = $region29
    $region28: #{tpu_custom_call.1} parent=1 // pred_region
      %s51 = ssub.s32 1024, 1024
      %52 = vsyncadd [#allocation6], %s51
      %s53 = sshll.u32 [#allocation7], 4
      %s54 = int_to_ptr.vmem [resolvable:$true] %s53
      %59 = dma.hbm_to_vmem [thread:$0]  %s6, 1024, %s54, [#allocation6], 256, 256, 16
    $region29: #{tpu_custom_call.1} parent=1 // pred_fallthru
      _
    // Predicated region
    $region30: #{tpu_custom_call.1} parent=1 // pred_check
      _
    $region31: #{tpu_custom_call.1} parent=1 // pred_check_branch
      %61 = sbr.rel (0) target = $region33
    $region32: #{tpu_custom_call.1} parent=1 // pred_region
      %s63 = ssub.s32 1024, 1024
      %64 = vsyncadd [#allocation9], %s63
      %s65 = sshll.u32 [#allocation8], 4
      %s66 = int_to_ptr.vmem [resolvable:$true] %s65
      %71 = dma.hbm_to_vmem [thread:$0]  %s7, 1024, %s66, [#allocation9], 256, 256, 16
    $region33: #{tpu_custom_call.1} parent=1 // pred_fallthru
      _
    // Predicated region
    $region34: #{tpu_custom_call.1} parent=1 // pred_check
      _
    $region35: #{tpu_custom_call.1} parent=1 // pred_check_branch
      %73 = sbr.rel (0) target = $region37
    $region36: #{tpu_custom_call.1} parent=1 // pred_region
      %s75 = ssub.s32 1024, 1024
      %76 = vsyncadd [#allocation9], %s75
      %s77 = sshll.u32 [#allocation10], 4
      %s78 = int_to_ptr.vmem [resolvable:$true] %s77
      %83 = dma.hbm_to_vmem [thread:$0]  %s8, 1024, %s78, [#allocation9], 512, 512, 32
    $region37: #{tpu_custom_call.1} parent=1 // pred_fallthru
      _
    // Predicated region
    $region38: #{tpu_custom_call.1} parent=1 // pred_check
      _
    $region39: #{tpu_custom_call.1} parent=1 // pred_check_branch
      %85 = sbr.rel (0) target = $region41
    $region40: #{tpu_custom_call.1} parent=1 // pred_region
      _
    $region41: #{tpu_custom_call.1} parent=1 // pred_fallthru
      _
    // Predicated region
    $region42: #{tpu_custom_call.1} parent=1 // pred_check
      _
    $region43: #{tpu_custom_call.1} parent=1 // pred_check_branch
      %87 = sbr.rel (0) target = $region45
    $region44: #{tpu_custom_call.1} parent=1 // pred_region
      %88 = dma.done [#allocation4], 64
    $region45: #{tpu_custom_call.1} parent=1 // pred_fallthru
      _
    // Predicated region
    $region46: #{tpu_custom_call.1} parent=1 // pred_check
      _
    $region47: #{tpu_custom_call.1} parent=1 // pred_check_branch
      %90 = sbr.rel (0) target = $region49
    $region48: #{tpu_custom_call.1} parent=1 // pred_region
      %91 = dma.done [#allocation6], 64
    $region49: #{tpu_custom_call.1} parent=1 // pred_fallthru
      _
    // Predicated region
    $region50: #{tpu_custom_call.1} parent=1 // pred_check
      _
    $region51: #{tpu_custom_call.1} parent=1 // pred_check_branch
      %93 = sbr.rel (0) target = $region53
    $region52: #{tpu_custom_call.1} parent=1 // pred_region
      %94 = dma.done [#allocation6], 1024
    $region53: #{tpu_custom_call.1} parent=1 // pred_fallthru
      _
    // Predicated region
    $region54: #{tpu_custom_call.1} parent=1 // pred_check
      _
    $region55: #{tpu_custom_call.1} parent=1 // pred_check_branch
      %96 = sbr.rel (0) target = $region57
    $region56: #{tpu_custom_call.1} parent=1 // pred_region
      %97 = dma.done [#allocation9], 1024
    $region57: #{tpu_custom_call.1} parent=1 // pred_fallthru
      _
    // Predicated region
    $region58: #{tpu_custom_call.1} parent=1 // pred_check
      _
    $region59: #{tpu_custom_call.1} parent=1 // pred_check_branch
      %99 = sbr.rel (0) target = $region61
    $region60: #{tpu_custom_call.1} parent=1 // pred_region
      %100 = dma.done [#allocation9], 1024
    $region61: #{tpu_custom_call.1} parent=1 // pred_fallthru
      _
    %v102 = vld [vmem:[%s0] sm:$0xff]
    %v103 = vpack.c.bf16 %v102, %v102
    %v104 = vld [vmem:[%s1] sm:$0xff]
    %v105 = vpack.c.bf16 %v104, %v104
    %v106 = vld [vmem:[#allocation7] sm:$0xff]
    %v107 = vld [vmem:[#allocation7 + $0x8] sm:$0xff]
    %v108 = vld [vmem:[#allocation7 + $0x10] sm:$0xff]
    %v109 = vld [vmem:[#allocation7 + $0x18] sm:$0xff]
    %v110 = vld [vmem:[#allocation7 + $0x20] sm:$0xff]
    %v111 = vld [vmem:[#allocation7 + $0x28] sm:$0xff]
    %v112 = vld [vmem:[#allocation7 + $0x30] sm:$0xff]
    %v113 = vld [vmem:[#allocation7 + $0x38] sm:$0xff]
    %v114 = vld [vmem:[#allocation8] sm:$0xff]
    %v115 = vld [vmem:[#allocation8 + $0x8] sm:$0xff]
    %v116 = vld [vmem:[#allocation8 + $0x10] sm:$0xff]
    %v117 = vld [vmem:[#allocation8 + $0x18] sm:$0xff]
    %v118 = vld [vmem:[#allocation8 + $0x20] sm:$0xff]
    %v119 = vld [vmem:[#allocation8 + $0x28] sm:$0xff]
    %v120 = vld [vmem:[#allocation8 + $0x30] sm:$0xff]
    %v121 = vld [vmem:[#allocation8 + $0x38] sm:$0xff]
    %v122 = vld [vmem:[#allocation3] sm:$0xf]
    %v124 = vlaneseq
    %v125 = vshrl.u32 %v124, 7
    %v126 = vsub.s32 0, %v125
    %v127 = vrot.slane %v122, %v126
    %v128 = vlaneseq
    %v129 = vshrl.u32 %v128, 7
    %v130 = vsub.s32 1, %v129
    %v131 = vrot.slane %v122, %v130
    %v132 = vlaneseq
    %v133 = vshrl.u32 %v132, 7
    %v134 = vsub.s32 2, %v133
    %v135 = vrot.slane %v122, %v134
    %v136 = vlaneseq
    %v137 = vshrl.u32 %v136, 7
    %v138 = vsub.s32 3, %v137
    %v139 = vrot.slane %v122, %v138
    %v152 = vunpack.c.l.b16 %v106
    %v153 = vunpack.c.h.b16 %v106
    %v154 = vunpack.c.l.b16 %v107
    %v155 = vunpack.c.h.b16 %v107
    %v156 = vunpack.c.l.b16 %v108
    %v157 = vunpack.c.h.b16 %v108
    %v158 = vunpack.c.l.b16 %v109
    %v159 = vunpack.c.h.b16 %v109
    %v160 = vunpack.c.l.b16 %v110
    %v161 = vunpack.c.h.b16 %v110
    %v162 = vunpack.c.l.b16 %v111
    %v163 = vunpack.c.h.b16 %v111
    %v164 = vunpack.c.l.b16 %v112
    %v165 = vunpack.c.h.b16 %v112
    %v166 = vunpack.c.l.b16 %v113
    %v167 = vunpack.c.h.b16 %v113
    %v168 = vpack.c.b16 %v156, %v152
    %v169 = vpack.c.b16 %v157, %v153
    %v170 = vpack.c.b16 %v158, %v154
    %v171 = vpack.c.b16 %v159, %v155
    %v172 = vpack.c.b16 %v164, %v160
    %v173 = vpack.c.b16 %v165, %v161
    %v174 = vpack.c.b16 %v166, %v162
    %v175 = vpack.c.b16 %v167, %v163
    %vm184 = vcmask 261120
    %v186 = vsel %vm184, %v103, 0
    %188 = vmatprep.subr.bf16.mxu0 %v169
    %189 = vmatpush1.bf16.msra.mxu0 %v168
    %190 = vmatprep.subr.bf16.mxu0 %v173
    %191 = vmatpush1.bf16.msra.mxu0 %v172
    %192 = vmatprep.subr.bf16.mxu0 0
    %193 = vmatpush1.bf16.msra.mxu0 0
    %194 = vmatprep.subr.bf16.mxu0 0
    %195 = vmatpush1.bf16.msra.mxu0 0
    %196 = vmatprep.subr.bf16.mxu0 0
    %197 = vmatpush1.bf16.msra.mxu0 0
    %198 = vmatprep.subr.bf16.mxu0 0
    %199 = vmatpush1.bf16.msra.mxu0 0
    %200 = vmatprep.subr.bf16.mxu0 0
    %201 = vmatpush1.bf16.msra.mxu0 0
    %202 = vmatprep.subr.bf16.mxu0 0
    %203 = vmatpush1.bf16.msra.mxu0 0
    %204 = vmatprep.subr.bf16.mxu0 0
    %205 = vmatpush1.bf16.msra.mxu0 0
    %206 = vmatprep.subr.bf16.mxu0 0
    %207 = vmatpush1.bf16.msra.mxu0 0
    %208 = vmatprep.subr.bf16.mxu0 0
    %209 = vmatpush1.bf16.msra.mxu0 0
    %210 = vmatprep.subr.bf16.mxu0 0
    %211 = vmatpush1.bf16.msra.mxu0 0
    %212 = vmatprep.subr.bf16.mxu0 0
    %213 = vmatpush1.bf16.msra.mxu0 0
    %214 = vmatprep.subr.bf16.mxu0 0
    %215 = vmatpush1.bf16.msra.mxu0 0
    %216 = vmatprep.subr.bf16.mxu0 0
    %217 = vmatpush1.bf16.msra.mxu0 0
    %218 = vmatprep.subr.bf16.mxu0 0
    %219 = vmatpush1.bf16.msra.mxu0 0
    %220 = vmatprep.mubr.bf16.mxu0 0
    %221 = vmatmul.mubr.bf16.gmra.mrb[0].mxu0 %v186
    %v222 = vpop.f32.mrb[0].mxu0
    %v223 = vadd.f32 %v127, %v222
    %v224 = vpop.f32.mrb[0].mxu0
    %v225 = vadd.f32 %v131, %v224
    %v226 = vpop.f32.mrb[0].mxu0
    %v227 = vpop.f32.mrb[0].mxu0
    %228 = vdwg.mxu0
    %229 = vmatprep.subr.bf16.mxu0 %v171
    %230 = vmatpush1.bf16.msra.mxu0 %v170
    %231 = vmatprep.subr.bf16.mxu0 %v175
    %232 = vmatpush1.bf16.msra.mxu0 %v174
    %233 = vmatprep.subr.bf16.mxu0 0
    %234 = vmatpush1.bf16.msra.mxu0 0
    %235 = vmatprep.subr.bf16.mxu0 0
    %236 = vmatpush1.bf16.msra.mxu0 0
    %237 = vmatprep.subr.bf16.mxu0 0
    %238 = vmatpush1.bf16.msra.mxu0 0
    %239 = vmatprep.subr.bf16.mxu0 0
    %240 = vmatpush1.bf16.msra.mxu0 0
    %241 = vmatprep.subr.bf16.mxu0 0
    %242 = vmatpush1.bf16.msra.mxu0 0
    %243 = vmatprep.subr.bf16.mxu0 0
    %244 = vmatpush1.bf16.msra.mxu0 0
    %245 = vmatprep.subr.bf16.mxu0 0
    %246 = vmatpush1.bf16.msra.mxu0 0
    %247 = vmatprep.subr.bf16.mxu0 0
    %248 = vmatpush1.bf16.msra.mxu0 0
    %249 = vmatprep.subr.bf16.mxu0 0
    %250 = vmatpush1.bf16.msra.mxu0 0
    %251 = vmatprep.subr.bf16.mxu0 0
    %252 = vmatpush1.bf16.msra.mxu0 0
    %253 = vmatprep.subr.bf16.mxu0 0
    %254 = vmatpush1.bf16.msra.mxu0 0
    %255 = vmatprep.subr.bf16.mxu0 0
    %256 = vmatpush1.bf16.msra.mxu0 0
    %257 = vmatprep.subr.bf16.mxu0 0
    %258 = vmatpush1.bf16.msra.mxu0 0
    %259 = vmatprep.subr.bf16.mxu0 0
    %260 = vmatpush1.bf16.msra.mxu0 0
    %261 = vmatprep.mubr.bf16.mxu0 0
    %262 = vmatmul.mubr.bf16.gmra.mrb[0].mxu0 %v186
    %v263 = vpop.f32.mrb[0].mxu0
    %v264 = vadd.f32 %v135, %v263
    %v265 = vpop.f32.mrb[0].mxu0
    %v266 = vadd.f32 %v139, %v265
    %v267 = vpop.f32.mrb[0].mxu0
    %v268 = vpop.f32.mrb[0].mxu0
    %269 = vdwg.mxu0
    %v270 = vtanh.pop %v223
    %v271 = vtanh.pop %v225
    %v272 = vtanh.pop %v264
    %v273 = vtanh.pop %v266
    %v274 = vld [vmem:[#allocation5] sm:$0xf]
    %v276 = vlaneseq
    %v277 = vshrl.u32 %v276, 7
    %v278 = vsub.s32 0, %v277
    %v279 = vrot.slane %v274, %v278
    %v280 = vlaneseq
    %v281 = vshrl.u32 %v280, 7
    %v282 = vsub.s32 1, %v281
    %v283 = vrot.slane %v274, %v282
    %v284 = vlaneseq
    %v285 = vshrl.u32 %v284, 7
    %v286 = vsub.s32 2, %v285
    %v287 = vrot.slane %v274, %v286
    %v288 = vlaneseq
    %v289 = vshrl.u32 %v288, 7
    %v290 = vsub.s32 3, %v289
    %v291 = vrot.slane %v274, %v290
    %v304 = vunpack.c.l.b16 %v114
    %v305 = vunpack.c.h.b16 %v114
    %v306 = vunpack.c.l.b16 %v115
    %v307 = vunpack.c.h.b16 %v115
    %v308 = vunpack.c.l.b16 %v116
    %v309 = vunpack.c.h.b16 %v116
    %v310 = vunpack.c.l.b16 %v117
    %v311 = vunpack.c.h.b16 %v117
    %v312 = vunpack.c.l.b16 %v118
    %v313 = vunpack.c.h.b16 %v118
    %v314 = vunpack.c.l.b16 %v119
    %v315 = vunpack.c.h.b16 %v119
    %v316 = vunpack.c.l.b16 %v120
    %v317 = vunpack.c.h.b16 %v120
    %v318 = vunpack.c.l.b16 %v121
    %v319 = vunpack.c.h.b16 %v121
    %v320 = vpack.c.b16 %v308, %v304
    %v321 = vpack.c.b16 %v309, %v305
    %v322 = vpack.c.b16 %v310, %v306
    %v323 = vpack.c.b16 %v311, %v307
    %v324 = vpack.c.b16 %v316, %v312
    %v325 = vpack.c.b16 %v317, %v313
    %v326 = vpack.c.b16 %v318, %v314
    %v327 = vpack.c.b16 %v319, %v315
    %v337 = vsel %vm184, %v105, 0
    %339 = vmatprep.subr.bf16.mxu0 %v321
    %340 = vmatpush1.bf16.msra.mxu0 %v320
    %341 = vmatprep.subr.bf16.mxu0 %v325
    %342 = vmatpush1.bf16.msra.mxu0 %v324
    %343 = vmatprep.subr.bf16.mxu0 0
    %344 = vmatpush1.bf16.msra.mxu0 0
    %345 = vmatprep.subr.bf16.mxu0 0
    %346 = vmatpush1.bf16.msra.mxu0 0
    %347 = vmatprep.subr.bf16.mxu0 0
    %348 = vmatpush1.bf16.msra.mxu0 0
    %349 = vmatprep.subr.bf16.mxu0 0
    %350 = vmatpush1.bf16.msra.mxu0 0
    %351 = vmatprep.subr.bf16.mxu0 0
    %352 = vmatpush1.bf16.msra.mxu0 0
    %353 = vmatprep.subr.bf16.mxu0 0
    %354 = vmatpush1.bf16.msra.mxu0 0
    %355 = vmatprep.subr.bf16.mxu0 0
    %356 = vmatpush1.bf16.msra.mxu0 0
    %357 = vmatprep.subr.bf16.mxu0 0
    %358 = vmatpush1.bf16.msra.mxu0 0
    %359 = vmatprep.subr.bf16.mxu0 0
    %360 = vmatpush1.bf16.msra.mxu0 0
    %361 = vmatprep.subr.bf16.mxu0 0
    %362 = vmatpush1.bf16.msra.mxu0 0
    %363 = vmatprep.subr.bf16.mxu0 0
    %364 = vmatpush1.bf16.msra.mxu0 0
    %365 = vmatprep.subr.bf16.mxu0 0
    %366 = vmatpush1.bf16.msra.mxu0 0
    %367 = vmatprep.subr.bf16.mxu0 0
    %368 = vmatpush1.bf16.msra.mxu0 0
    %369 = vmatprep.subr.bf16.mxu0 0
    %370 = vmatpush1.bf16.msra.mxu0 0
    %371 = vmatprep.mubr.bf16.mxu0 0
    %372 = vmatmul.mubr.bf16.gmra.mrb[0].mxu0 %v337
    %v373 = vpop.f32.mrb[0].mxu0
    %v374 = vadd.f32 %v279, %v373
    %v375 = vpop.f32.mrb[0].mxu0
    %v376 = vadd.f32 %v283, %v375
    %v377 = vpop.f32.mrb[0].mxu0
    %v378 = vpop.f32.mrb[0].mxu0
    %379 = vdwg.mxu0
    %380 = vmatprep.subr.bf16.mxu0 %v323
    %381 = vmatpush1.bf16.msra.mxu0 %v322
    %382 = vmatprep.subr.bf16.mxu0 %v327
    %383 = vmatpush1.bf16.msra.mxu0 %v326
    %384 = vmatprep.subr.bf16.mxu0 0
    %385 = vmatpush1.bf16.msra.mxu0 0
    %386 = vmatprep.subr.bf16.mxu0 0
    %387 = vmatpush1.bf16.msra.mxu0 0
    %388 = vmatprep.subr.bf16.mxu0 0
    %389 = vmatpush1.bf16.msra.mxu0 0
    %390 = vmatprep.subr.bf16.mxu0 0
    %391 = vmatpush1.bf16.msra.mxu0 0
    %392 = vmatprep.subr.bf16.mxu0 0
    %393 = vmatpush1.bf16.msra.mxu0 0
    %394 = vmatprep.subr.bf16.mxu0 0
    %395 = vmatpush1.bf16.msra.mxu0 0
    %396 = vmatprep.subr.bf16.mxu0 0
    %397 = vmatpush1.bf16.msra.mxu0 0
    %398 = vmatprep.subr.bf16.mxu0 0
    %399 = vmatpush1.bf16.msra.mxu0 0
    %400 = vmatprep.subr.bf16.mxu0 0
    %401 = vmatpush1.bf16.msra.mxu0 0
    %402 = vmatprep.subr.bf16.mxu0 0
    %403 = vmatpush1.bf16.msra.mxu0 0
    %404 = vmatprep.subr.bf16.mxu0 0
    %405 = vmatpush1.bf16.msra.mxu0 0
    %406 = vmatprep.subr.bf16.mxu0 0
    %407 = vmatpush1.bf16.msra.mxu0 0
    %408 = vmatprep.subr.bf16.mxu0 0
    %409 = vmatpush1.bf16.msra.mxu0 0
    %410 = vmatprep.subr.bf16.mxu0 0
    %411 = vmatpush1.bf16.msra.mxu0 0
    %412 = vmatprep.mubr.bf16.mxu0 0
    %413 = vmatmul.mubr.bf16.gmra.mrb[0].mxu0 %v337
    %v414 = vpop.f32.mrb[0].mxu0
    %v415 = vadd.f32 %v287, %v414
    %v416 = vpop.f32.mrb[0].mxu0
    %v417 = vadd.f32 %v291, %v416
    %v418 = vpop.f32.mrb[0].mxu0
    %v419 = vpop.f32.mrb[0].mxu0
    %420 = vdwg.mxu0
    %v421 = vtanh.pop %v374
    %v422 = vtanh.pop %v376
    %v423 = vtanh.pop %v415
    %v424 = vtanh.pop %v417
    %v425 = vsub.f32 %v270, %v421
    %v426 = vsub.f32 %v271, %v422
    %v427 = vsub.f32 %v272, %v423
    %v428 = vsub.f32 %v273, %v424
    %v429 = vld [vmem:[#allocation10] sm:$0xff]
    %v430 = vld [vmem:[#allocation10 + $0x8] sm:$0xff]
    %v431 = vld [vmem:[#allocation10 + $0x10] sm:$0xff]
    %v432 = vld [vmem:[#allocation10 + $0x18] sm:$0xff]
    %v433 = vld [vmem:[#allocation10 + $0x20] sm:$0xff]
    %v434 = vld [vmem:[#allocation10 + $0x28] sm:$0xff]
    %v435 = vld [vmem:[#allocation10 + $0x30] sm:$0xff]
    %v436 = vld [vmem:[#allocation10 + $0x38] sm:$0xff]
    %v437 = vld [vmem:[#allocation2] sm:$0x1]
    %v439 = vlaneseq
    %v440 = vshrl.u32 %v439, 7
    %v441 = vsub.s32 0, %v440
    %v442 = vrot.slane %v437, %v441
    %443 = vset.pattern.permute.xlu0 0
    %444 = vperm.xlu0 %443, %v442
    %v445 = vpop.permute.xlu0 %444
    %447 = vmatprep.subr.mxu0 %v430
    %448 = vmatpush1.xpose.msra.mxu0 %v429
    %449 = vmatprep.subr.mxu0 %v434
    %450 = vmatpush1.xpose.msra.mxu0 %v433
    %451 = vmatprep.subr.mxu0 0.0
    %452 = vmatpush1.xpose.msra.mxu0 0.0
    %453 = vmatprep.subr.mxu0 0.0
    %454 = vmatpush1.xpose.msra.mxu0 0.0
    %455 = vmatprep.subr.mxu0 0.0
    %456 = vmatpush1.xpose.msra.mxu0 0.0
    %457 = vmatprep.subr.mxu0 0.0
    %458 = vmatpush1.xpose.msra.mxu0 0.0
    %459 = vmatprep.subr.mxu0 0.0
    %460 = vmatpush1.xpose.msra.mxu0 0.0
    %461 = vmatprep.subr.mxu0 0.0
    %462 = vmatpush1.xpose.msra.mxu0 0.0
    %463 = vmatprep.subr.mxu0 0.0
    %464 = vmatpush1.xpose.msra.mxu0 0.0
    %465 = vmatprep.subr.mxu0 0.0
    %466 = vmatpush1.xpose.msra.mxu0 0.0
    %467 = vmatprep.subr.mxu0 0.0
    %468 = vmatpush1.xpose.msra.mxu0 0.0
    %469 = vmatprep.subr.mxu0 0.0
    %470 = vmatpush1.xpose.msra.mxu0 0.0
    %471 = vmatprep.subr.mxu0 0.0
    %472 = vmatpush1.xpose.msra.mxu0 0.0
    %473 = vmatprep.subr.mxu0 0.0
    %474 = vmatpush1.xpose.msra.mxu0 0.0
    %475 = vmatprep.subr.mxu0 0.0
    %476 = vmatpush1.xpose.msra.mxu0 0.0
    %477 = vmatprep.subr.mxu0 0.0
    %478 = vmatpush1.xpose.msra.mxu0 0.0
    %479 = vmatprep.subr.mxu0 0.0
    %480 = vmatpush1.xpose.msra.mxu0 0.0
    %481 = vmatprep.subr.mxu0 0.0
    %482 = vmatpush1.xpose.msra.mxu0 0.0
    %483 = vmatprep.subr.mxu0 0.0
    %484 = vmatpush1.xpose.msra.mxu0 0.0
    %485 = vmatprep.subr.mxu0 0.0
    %486 = vmatpush1.xpose.msra.mxu0 0.0
    %487 = vmatprep.subr.mxu0 0.0
    %488 = vmatpush1.xpose.msra.mxu0 0.0
    %489 = vmatprep.subr.mxu0 0.0
    %490 = vmatpush1.xpose.msra.mxu0 0.0
    %491 = vmatprep.subr.mxu0 0.0
    %492 = vmatpush1.xpose.msra.mxu0 0.0
    %493 = vmatprep.subr.mxu0 0.0
    %494 = vmatpush1.xpose.msra.mxu0 0.0
    %495 = vmatprep.subr.mxu0 0.0
    %496 = vmatpush1.xpose.msra.mxu0 0.0
    %497 = vmatprep.subr.mxu0 0.0
    %498 = vmatpush1.xpose.msra.mxu0 0.0
    %499 = vmatprep.subr.mxu0 0.0
    %500 = vmatpush1.xpose.msra.mxu0 0.0
    %501 = vmatprep.subr.mxu0 0.0
    %502 = vmatpush1.xpose.msra.mxu0 0.0
    %503 = vmatprep.subr.mxu0 0.0
    %504 = vmatpush1.xpose.msra.mxu0 0.0
    %505 = vmatprep.subr.mxu0 0.0
    %506 = vmatpush1.xpose.msra.mxu0 0.0
    %507 = vmatprep.subr.mxu0 0.0
    %508 = vmatpush1.xpose.msra.mxu0 0.0
    %509 = vmatprep.subr.mxu0 0.0
    %510 = vmatpush1.xpose.msra.mxu0 0.0
    %511 = vmatprep.mubr.f32.mxu0 %v426
    %512 = vmatmul.mubr.f32.gmra.mrb[0].mxu0 %v425
    %v513 = vpop.f32.mrb[0].mxu0
    %v514 = vadd.f32 %v445, %v513
    %v515 = vpop.f32.mrb[0].mxu0
    %516 = vdwg.mxu0
    %517 = vmatprep.subr.mxu0 %v432
    %518 = vmatpush1.xpose.msra.mxu0 %v431
    %519 = vmatprep.subr.mxu0 %v436
    %520 = vmatpush1.xpose.msra.mxu0 %v435
    %521 = vmatprep.subr.mxu0 0.0
    %522 = vmatpush1.xpose.msra.mxu0 0.0
    %523 = vmatprep.subr.mxu0 0.0
    %524 = vmatpush1.xpose.msra.mxu0 0.0
    %525 = vmatprep.subr.mxu0 0.0
    %526 = vmatpush1.xpose.msra.mxu0 0.0
    %527 = vmatprep.subr.mxu0 0.0
    %528 = vmatpush1.xpose.msra.mxu0 0.0
    %529 = vmatprep.subr.mxu0 0.0
    %530 = vmatpush1.xpose.msra.mxu0 0.0
    %531 = vmatprep.subr.mxu0 0.0
    %532 = vmatpush1.xpose.msra.mxu0 0.0
    %533 = vmatprep.subr.mxu0 0.0
    %534 = vmatpush1.xpose.msra.mxu0 0.0
    %535 = vmatprep.subr.mxu0 0.0
    %536 = vmatpush1.xpose.msra.mxu0 0.0
    %537 = vmatprep.subr.mxu0 0.0
    %538 = vmatpush1.xpose.msra.mxu0 0.0
    %539 = vmatprep.subr.mxu0 0.0
    %540 = vmatpush1.xpose.msra.mxu0 0.0
    %541 = vmatprep.subr.mxu0 0.0
    %542 = vmatpush1.xpose.msra.mxu0 0.0
    %543 = vmatprep.subr.mxu0 0.0
    %544 = vmatpush1.xpose.msra.mxu0 0.0
    %545 = vmatprep.subr.mxu0 0.0
    %546 = vmatpush1.xpose.msra.mxu0 0.0
    %547 = vmatprep.subr.mxu0 0.0
    %548 = vmatpush1.xpose.msra.mxu0 0.0
    %549 = vmatprep.subr.mxu0 0.0
    %550 = vmatpush1.xpose.msra.mxu0 0.0
    %551 = vmatprep.subr.mxu0 0.0
    %552 = vmatpush1.xpose.msra.mxu0 0.0
    %553 = vmatprep.subr.mxu0 0.0
    %554 = vmatpush1.xpose.msra.mxu0 0.0
    %555 = vmatprep.subr.mxu0 0.0
    %556 = vmatpush1.xpose.msra.mxu0 0.0
    %557 = vmatprep.subr.mxu0 0.0
    %558 = vmatpush1.xpose.msra.mxu0 0.0
    %559 = vmatprep.subr.mxu0 0.0
    %560 = vmatpush1.xpose.msra.mxu0 0.0
    %561 = vmatprep.subr.mxu0 0.0
    %562 = vmatpush1.xpose.msra.mxu0 0.0
    %563 = vmatprep.subr.mxu0 0.0
    %564 = vmatpush1.xpose.msra.mxu0 0.0
    %565 = vmatprep.subr.mxu0 0.0
    %566 = vmatpush1.xpose.msra.mxu0 0.0
    %567 = vmatprep.subr.mxu0 0.0
    %568 = vmatpush1.xpose.msra.mxu0 0.0
    %569 = vmatprep.subr.mxu0 0.0
    %570 = vmatpush1.xpose.msra.mxu0 0.0
    %571 = vmatprep.subr.mxu0 0.0
    %572 = vmatpush1.xpose.msra.mxu0 0.0
    %573 = vmatprep.subr.mxu0 0.0
    %574 = vmatpush1.xpose.msra.mxu0 0.0
    %575 = vmatprep.subr.mxu0 0.0
    %576 = vmatpush1.xpose.msra.mxu0 0.0
    %577 = vmatprep.subr.mxu0 0.0
    %578 = vmatpush1.xpose.msra.mxu0 0.0
    %579 = vmatprep.subr.mxu0 0.0
    %580 = vmatpush1.xpose.msra.mxu0 0.0
    %581 = vmatprep.mubr.f32.mxu0 %v428
    %582 = vmatmul.mubr.f32.gmra.mrb[0].mxu0 %v427
    %v583 = vpop.f32.mrb[0].mxu0
    %v584 = vadd.f32 %v514, %v583
    %v585 = vpop.f32.mrb[0].mxu0
    %586 = vdwg.mxu0
    %v587 = vmul.f32 %v584, 0.5
    %v588 = vtanh.pop %v587
    %v589 = vadd.f32 %v588, 1.0
    %v590 = vmul.f32 %v589, 0.5
    %v591 = vld [vmem:[%s4] sm:$0xff]
    %v592 = vmul.f32 %v590, %v591
    %vm593 = vcmask 130048
    %v594 = vsel %vm593, %v592, 0.0
    %595 = vadd.xlane.f32.xlu0 %v594
    %v596 = vpop.xlane.xlu0 %595
    %v597 = vld [vmem:[%s5] sm:$0xff]
    %v598 = vmul.f32 %v596, %v597
    %vm599 = vcmask 7168
    %600 = vst.msk [vmem:[%s10] sm:$0xff] %vm599, %v598
    // Predicated region
    $region62: #{tpu_custom_call.1} parent=1 // pred_check
      _
    $region63: #{tpu_custom_call.1} parent=1 // pred_check_branch
      %602 = sbr.rel (0) target = $region65
    $region64: #{tpu_custom_call.1} parent=1 // pred_region
      _
    $region65: #{tpu_custom_call.1} parent=1 // pred_fallthru
      _
    // Predicated region
    $region66: #{tpu_custom_call.1} parent=1 // pred_check
      _
    $region67: #{tpu_custom_call.1} parent=1 // pred_check_branch
      %604 = sbr.rel (0) target = $region69
    $region68: #{tpu_custom_call.1} parent=1 // pred_region
      _
    $region69: #{tpu_custom_call.1} parent=1 // pred_fallthru
      _
    %605 = vsyncpa [#allocation4], 1
    %606 = vsyncpa [#allocation6], 1
    %607 = vsyncpa [#allocation9], 1

</llo_original>
